<compile_context>
chip_gen: v7x
topology: tpu7x:2x2x1
jax: 0.10.0
libtpu: 0.0.40
codegen_flags: <defaults>
</compile_context>

<pallas_src>
import functools

import jax
import jax.numpy as jnp
from jax.experimental import pallas as pl
from jax.experimental.pallas import tpu as pltpu


AP = 128          # padded lane width per output head (mean / log_std)
H1P = 512         # 400 padded up to a multiple of 128
H2P = 384         # 300 padded up to a multiple of 128


def _round_up(x, m):
    return (x + m - 1) // m * m


def _pad_to(x, shape):
    return jnp.pad(x, [(0, t - s) for s, t in zip(x.shape, shape)])


# ----------------------------- kernel ------------------------------------


def _actor_kernel(state_ref, w1_ref, b1_ref, w2_ref, b2_ref, wh_ref, bh_ref,
                  noise_ref, out_ref, *, max_action):
    # layer 1: relu(state @ W1 + b1)   (bf16 operands, f32 accumulation)
    x = state_ref[...].astype(jnp.bfloat16)
    h = jnp.dot(x, w1_ref[...], preferred_element_type=jnp.float32) + b1_ref[...]
    h = jnp.maximum(h, 0.0)

    # layer 2: relu(h @ W2 + b2)
    h = jnp.dot(h.astype(jnp.bfloat16), w2_ref[...],
                preferred_element_type=jnp.float32) + b2_ref[...]
    h = jnp.maximum(h, 0.0)

    # fused heads: [mean | log_std] in one matmul, split at a 128-lane boundary
    head = jnp.dot(h.astype(jnp.bfloat16), wh_ref[...],
                   preferred_element_type=jnp.float32) + bh_ref[...]
    mean_a = head[:, :AP]
    log_std_a = head[:, AP:]

    # reparameterized sample + squash (VPU / EUP work, free under DMA slack)
    z = mean_a + jnp.exp(log_std_a) * noise_ref[...]
    out_ref[...] = (max_action * jnp.tanh(z)).astype(out_ref.dtype)


# --------------------------- param packing --------------------------------


def pack_params(params, action_dim):
    """Zero-pad to lane-friendly shapes, fuse the heads, cast weights to bf16.

    Done once per parameter set (not per forward call).
    """
    w1, b1, w2, b2, wm, bm, ws, bs = params
    state_dim = w1.shape[0]

    w1p = _pad_to(w1, (state_dim, H1P)).astype(jnp.bfloat16)
    b1p = _pad_to(b1, (1, H1P))
    w2p = _pad_to(w2, (H1P, H2P)).astype(jnp.bfloat16)
    b2p = _pad_to(b2, (1, H2P))

    # fused head weight: columns [0:A) = mean head, [128:128+A) = log_std head
    whp = jnp.zeros((H2P, 2 * AP), jnp.float32)
    whp = whp.at[: wm.shape[0], :action_dim].set(wm)
    whp = whp.at[: ws.shape[0], AP:AP + action_dim].set(ws)
    whp = whp.astype(jnp.bfloat16)

    bhp = jnp.zeros((1, 2 * AP), jnp.float32)
    bhp = bhp.at[:, :action_dim].set(bm)
    bhp = bhp.at[:, AP:AP + action_dim].set(bs)

    return w1p, b1p, w2p, b2p, whp, bhp


# ------------------------------ wrapper -----------------------------------


def regular_actor_forward(state, packed, noise, max_action, action_dim, *,
                          block_b=256):
    """state: [B, state_dim] f32, noise: [B, action_dim] f32."""
    w1p, b1p, w2p, b2p, whp, bhp = packed
    B, S = state.shape

    bb = min(block_b, _round_up(B, 8))      # rows per grid step (sublane mult.)
    Bp = _round_up(B, bb)
    state_p = _pad_to(state, (Bp, S))
    noise_p = _pad_to(noise, (Bp, AP))

    const = lambda i: (0, 0)                # weights resident across grid steps

    out = pl.pallas_call(
        functools.partial(_actor_kernel, max_action=max_action),
        out_shape=jax.ShapeDtypeStruct((Bp, AP), jnp.float32),
        grid=(Bp // bb,),
        in_specs=[
            pl.BlockSpec((bb, S), lambda i: (i, 0)),     # state tile
            pl.BlockSpec(w1p.shape, const),
            pl.BlockSpec(b1p.shape, const),
            pl.BlockSpec(w2p.shape, const),
            pl.BlockSpec(b2p.shape, const),
            pl.BlockSpec(whp.shape, const),
            pl.BlockSpec(bhp.shape, const),
            pl.BlockSpec((bb, AP), lambda i: (i, 0)),    # noise tile
        ],
        out_specs=pl.BlockSpec((bb, AP), lambda i: (i, 0)),
        compiler_params=pltpu.CompilerParams(
            dimension_semantics=("parallel",)),
    )(state_p, w1p, b1p, w2p, b2p, whp, bhp, noise_p)

    return out[:B, :action_dim]


# ------------------------- init & references ------------------------------


def init_params(key, state_dim, action_dim):
    """Deterministic synthetic init (shapes match the nn.Linear layers)."""
    ks = jax.random.split(key, 8)

    def lin(kw, kb, fan_in, fan_out):
        bound = 1.0 / jnp.sqrt(fan_in)
        w = jax.random.uniform(kw, (fan_in, fan_out), jnp.float32, -bound, bound)
        b = jax.random.uniform(kb, (1, fan_out), jnp.float32, -bound, bound)
        return w, b

    w1, b1 = lin(ks[0], ks[1], state_dim, 400)
    w2, b2 = lin(ks[2], ks[3], 400, 300)
    wm, bm = lin(ks[4], ks[5], 300, action_dim)
    ws, bs = lin(ks[6], ks[7], 300, action_dim)
    return (w1, b1, w2, b2, wm, bm, ws, bs)


def reference_forward_f32(state, params, noise, max_action):
    w1, b1, w2, b2, wm, bm, ws, bs = params
    a = jax.nn.relu(state @ w1 + b1)
    a = jax.nn.relu(a @ w2 + b2)
    mean_a = a @ wm + bm
    log_std_a = a @ ws + bs
    z = mean_a + jnp.exp(log_std_a) * noise
    return max_action * jnp.tanh(z)


def reference_forward_bf16(state, params, noise, max_action):
    """Mirrors the kernel's numerics: bf16 weights/activations, f32 accum."""
    w1, b1, w2, b2, wm, bm, ws, bs = params
    c = lambda t: t.astype(jnp.bfloat16)
    a = jax.nn.relu(jnp.dot(c(state), c(w1), preferred_element_type=jnp.float32) + b1)
    a = jax.nn.relu(jnp.dot(c(a), c(w2), preferred_element_type=jnp.float32) + b2)
    mean_a = jnp.dot(c(a), c(wm), preferred_element_type=jnp.float32) + bm
    log_std_a = jnp.dot(c(a), c(ws), preferred_element_type=jnp.float32) + bs
    z = mean_a + jnp.exp(log_std_a) * noise
    return max_action * jnp.tanh(z)


# -------------------------------- main ------------------------------------


if __name__ == "__main__":
    key = jax.random.PRNGKey(0)
    k_params, k_state, k_noise = jax.random.split(key, 3)

    batch = 8
    state_dim = 16
    action_dim = 8
    max_action = 1.0

    params = init_params(k_params, state_dim, action_dim)
    packed = pack_params(params, action_dim)

    state = jax.random.normal(k_state, (batch, state_dim), jnp.float32)
    noise = jax.random.normal(k_noise, (batch, action_dim), jnp.float32)

    out = regular_actor_forward(state, packed, noise, max_action, action_dim)
    out = jax.block_until_ready(out)
    assert out.shape == (batch, action_dim)

    # Tight check against a reference that uses the same bf16-weight math
    # (verifies the padding / head-fusion / tiling wiring of the kernel).
    ref_b = reference_forward_bf16(state, params, noise, max_action)
    assert jnp.allclose(out, ref_b, atol=1e-2, rtol=1e-2)

    # Looser check against the pure-f32 reference (bf16 weights are the only
    # approximation; output is tanh-bounded so absolute error stays small).
    ref_f = reference_forward_f32(state, params, noise, max_action)
    assert jnp.allclose(out, ref_f, atol=5e-2, rtol=5e-2)

    print("KERNEL_OK")
</pallas_src>

<mosaic_0001>
module attributes {stable_mosaic.version = 11 : i64} {
  func.func @_actor_kernel(%arg0: i32, %arg1: memref<8x16xf32, #tpu.memory_space<vmem>>, %arg2: memref<16x512xbf16, #tpu.memory_space<vmem>>, %arg3: memref<1x512xf32, #tpu.memory_space<vmem>>, %arg4: memref<512x384xbf16, #tpu.memory_space<vmem>>, %arg5: memref<1x384xf32, #tpu.memory_space<vmem>>, %arg6: memref<384x256xbf16, #tpu.memory_space<vmem>>, %arg7: memref<1x256xf32, #tpu.memory_space<vmem>>, %arg8: memref<8x128xf32, #tpu.memory_space<vmem>>, %arg9: memref<8x128xf32, #tpu.memory_space<vmem>>) attributes {dimension_semantics = [#tpu.dimension_semantics<parallel>], iteration_bounds = array<i64: 1>, scalar_prefetch = 0 : i64, scratch_operands = 0 : i64, tpu.core_type = #tpu.core_type<tc>, window_params = [{transform_indices = @transform_0, window_bounds = array<i64: 8, 16>}, {pipeline_mode = #tpu.pipeline_mode<synchronous>, transform_indices = @transform_1, window_bounds = array<i64: 16, 512>}, {pipeline_mode = #tpu.pipeline_mode<synchronous>, transform_indices = @transform_2, window_bounds = array<i64: 1, 512>}, {pipeline_mode = #tpu.pipeline_mode<synchronous>, transform_indices = @transform_3, window_bounds = array<i64: 512, 384>}, {pipeline_mode = #tpu.pipeline_mode<synchronous>, transform_indices = @transform_4, window_bounds = array<i64: 1, 384>}, {pipeline_mode = #tpu.pipeline_mode<synchronous>, transform_indices = @transform_5, window_bounds = array<i64: 384, 256>}, {pipeline_mode = #tpu.pipeline_mode<synchronous>, transform_indices = @transform_6, window_bounds = array<i64: 1, 256>}, {transform_indices = @transform_7, window_bounds = array<i64: 8, 128>}, {transform_indices = @transform_8, window_bounds = array<i64: 8, 128>}]} {
    %c0 = arith.constant 0 : index
    %c0_0 = arith.constant 0 : index
    %0 = vector.load %arg1[%c0, %c0_0] : memref<8x16xf32, #tpu.memory_space<vmem>>, vector<8x16xf32>
    %1 = arith.truncf %0 : vector<8x16xf32> to vector<8x16xbf16>
    %c0_1 = arith.constant 0 : index
    %c0_2 = arith.constant 0 : index
    %2 = vector.load %arg2[%c0_1, %c0_2] : memref<16x512xbf16, #tpu.memory_space<vmem>>, vector<16x512xbf16>
    %cst = arith.constant dense<0.000000e+00> : vector<8x512xf32>
    %3 = tpu.matmul %1, %2, %cst {dimension_numbers = #tpu.dot_dimension_numbers<[1], [0], [0], [1], [0, 0, 1, 1], [], []>} : vector<8x16xbf16>, vector<16x512xbf16>, vector<8x512xf32> -> vector<8x512xf32>
    %c0_3 = arith.constant 0 : index
    %c0_4 = arith.constant 0 : index
    %4 = vector.load %arg3[%c0_3, %c0_4] : memref<1x512xf32, #tpu.memory_space<vmem>>, vector<1x512xf32>
    %5 = vector.broadcast %4 : vector<1x512xf32> to vector<8x512xf32>
    %6 = arith.addf %3, %5 : vector<8x512xf32>
    %cst_5 = arith.constant 0.000000e+00 : f32
    %7 = vector.broadcast %cst_5 : f32 to vector<8x512xf32>
    %8 = arith.maximumf %6, %7 : vector<8x512xf32>
    %9 = arith.truncf %8 : vector<8x512xf32> to vector<8x512xbf16>
    %c0_6 = arith.constant 0 : index
    %c0_7 = arith.constant 0 : index
    %10 = vector.load %arg4[%c0_6, %c0_7] : memref<512x384xbf16, #tpu.memory_space<vmem>>, vector<512x384xbf16>
    %cst_8 = arith.constant dense<0.000000e+00> : vector<8x384xf32>
    %11 = tpu.matmul %9, %10, %cst_8 {dimension_numbers = #tpu.dot_dimension_numbers<[1], [0], [0], [1], [0, 0, 1, 1], [], []>} : vector<8x512xbf16>, vector<512x384xbf16>, vector<8x384xf32> -> vector<8x384xf32>
    %c0_9 = arith.constant 0 : index
    %c0_10 = arith.constant 0 : index
    %12 = vector.load %arg5[%c0_9, %c0_10] : memref<1x384xf32, #tpu.memory_space<vmem>>, vector<1x384xf32>
    %13 = vector.broadcast %12 : vector<1x384xf32> to vector<8x384xf32>
    %14 = arith.addf %11, %13 : vector<8x384xf32>
    %cst_11 = arith.constant 0.000000e+00 : f32
    %15 = vector.broadcast %cst_11 : f32 to vector<8x384xf32>
    %16 = arith.maximumf %14, %15 : vector<8x384xf32>
    %17 = arith.truncf %16 : vector<8x384xf32> to vector<8x384xbf16>
    %c0_12 = arith.constant 0 : index
    %c0_13 = arith.constant 0 : index
    %18 = vector.load %arg6[%c0_12, %c0_13] : memref<384x256xbf16, #tpu.memory_space<vmem>>, vector<384x256xbf16>
    %cst_14 = arith.constant dense<0.000000e+00> : vector<8x256xf32>
    %19 = tpu.matmul %17, %18, %cst_14 {dimension_numbers = #tpu.dot_dimension_numbers<[1], [0], [0], [1], [0, 0, 1, 1], [], []>} : vector<8x384xbf16>, vector<384x256xbf16>, vector<8x256xf32> -> vector<8x256xf32>
    %c0_15 = arith.constant 0 : index
    %c0_16 = arith.constant 0 : index
    %20 = vector.load %arg7[%c0_15, %c0_16] : memref<1x256xf32, #tpu.memory_space<vmem>>, vector<1x256xf32>
    %21 = vector.broadcast %20 : vector<1x256xf32> to vector<8x256xf32>
    %22 = arith.addf %19, %21 : vector<8x256xf32>
    %23 = vector.extract_strided_slice %22 {offsets = [0, 0], sizes = [8, 128], strides = [1, 1]} : vector<8x256xf32> to vector<8x128xf32>
    %24 = vector.extract_strided_slice %22 {offsets = [0, 128], sizes = [8, 128], strides = [1, 1]} : vector<8x256xf32> to vector<8x128xf32>
    %25 = math.exp %24 : vector<8x128xf32>
    %c0_17 = arith.constant 0 : index
    %c0_18 = arith.constant 0 : index
    %26 = vector.load %arg8[%c0_17, %c0_18] : memref<8x128xf32, #tpu.memory_space<vmem>>, vector<8x128xf32>
    %27 = arith.mulf %25, %26 : vector<8x128xf32>
    %28 = arith.addf %23, %27 : vector<8x128xf32>
    %29 = math.tanh %28 : vector<8x128xf32>
    %cst_19 = arith.constant 1.000000e+00 : f32
    %30 = vector.broadcast %cst_19 : f32 to vector<8x128xf32>
    %31 = arith.mulf %30, %29 : vector<8x128xf32>
    %c0_20 = arith.constant 0 : index
    %c0_21 = arith.constant 0 : index
    %32 = vector.load %arg9[%c0_20, %c0_21] : memref<8x128xf32, #tpu.memory_space<vmem>>, vector<8x128xf32>
    tpu.vector_store %arg9[%c0_20, %c0_21], %31 {strides = array<i32>} : memref<8x128xf32, #tpu.memory_space<vmem>>, vector<8x128xf32>,
    return
  }
  func.func @transform_0(%arg0: i32) -> (i32, i32) {
    %c0_i32 = arith.constant 0 : i32
    %c0_i32_0 = arith.constant 0 : i32
    return %arg0, %c0_i32 : i32, i32
  }
  func.func @transform_1(%arg0: i32) -> (i32, i32) {
    %c0_i32 = arith.constant 0 : i32
    %c0_i32_0 = arith.constant 0 : i32
    %c0_i32_1 = arith.constant 0 : i32
    return %c0_i32, %c0_i32_0 : i32, i32
  }
  func.func @transform_2(%arg0: i32) -> (i32, i32) {
    %c0_i32 = arith.constant 0 : i32
    %c0_i32_0 = arith.constant 0 : i32
    %c0_i32_1 = arith.constant 0 : i32
    return %c0_i32, %c0_i32_0 : i32, i32
  }
  func.func @transform_3(%arg0: i32) -> (i32, i32) {
    %c0_i32 = arith.constant 0 : i32
    %c0_i32_0 = arith.constant 0 : i32
    %c0_i32_1 = arith.constant 0 : i32
    return %c0_i32, %c0_i32_0 : i32, i32
  }
  func.func @transform_4(%arg0: i32) -> (i32, i32) {
    %c0_i32 = arith.constant 0 : i32
    %c0_i32_0 = arith.constant 0 : i32
    %c0_i32_1 = arith.constant 0 : i32
    return %c0_i32, %c0_i32_0 : i32, i32
  }
  func.func @transform_5(%arg0: i32) -> (i32, i32) {
    %c0_i32 = arith.constant 0 : i32
    %c0_i32_0 = arith.constant 0 : i32
    %c0_i32_1 = arith.constant 0 : i32
    return %c0_i32, %c0_i32_0 : i32, i32
  }
  func.func @transform_6(%arg0: i32) -> (i32, i32) {
    %c0_i32 = arith.constant 0 : i32
    %c0_i32_0 = arith.constant 0 : i32
    %c0_i32_1 = arith.constant 0 : i32
    return %c0_i32, %c0_i32_0 : i32, i32
  }
  func.func @transform_7(%arg0: i32) -> (i32, i32) {
    %c0_i32 = arith.constant 0 : i32
    %c0_i32_0 = arith.constant 0 : i32
    return %arg0, %c0_i32 : i32, i32
  }
  func.func @transform_8(%arg0: i32) -> (i32, i32) {
    %c0_i32 = arith.constant 0 : i32
    %c0_i32_0 = arith.constant 0 : i32
    return %arg0, %c0_i32 : i32, i32
  }
}

</mosaic_0001>

<llo_original>
// kernel: tpu_custom_call.1
$region0: #{tpu_custom_call.1}
  #allocation0 [shape = 'u32[]', space=smem, size = 0x4, offset = 0x4, fixed_abs, tag = 'smem constant byte address 0x4 - core index']
  #allocation1 [shape = 'u32[144,128]{1,0:T(1,128)}', space=vmem, size = 0x12000, scoped, tag = 'internal scratch']
  %s0 = inlined_call_operand.hbm [shape: f32[8,16], index: 0, kind: input, shape index: {}]
  %s1 = inlined_call_operand.hbm [shape: bf16[16,512], index: 1, kind: input, shape index: {}]
  %s2 = inlined_call_operand.vmem [shape: f32[1,512], index: 2, kind: input, shape index: {}]
  %s3 = inlined_call_operand.hbm [shape: bf16[512,384], index: 3, kind: input, shape index: {}]
  %s4 = inlined_call_operand.vmem [shape: f32[1,384], index: 4, kind: input, shape index: {}]
  %s5 = inlined_call_operand.hbm [shape: bf16[384,256], index: 5, kind: input, shape index: {}]
  %s6 = inlined_call_operand.vmem [shape: f32[1,256], index: 6, kind: input, shape index: {}]
  %s7 = inlined_call_operand.vmem [shape: f32[8,128], index: 7, kind: input, shape index: {}]
  %s8 = inlined_call_operand.hbm [shape: f32[8,128], index: 8, kind: output, shape index: {}]
  %s9 = sld [smem:[#allocation0]]
  $region58: #{tpu_custom_call.1} parent=0
    _
  %s11 = ssub.s32 1, %s9
  %s12 = scalar_select 0, %s11, %s9
  $region1: #{tpu_custom_call.1} parent=0
    #allocation2 [shape = 'u8[4096]{0}', space=vmem, size = 0x1000, scoped, tag = 'input window, operand 0, single buffered']
    #allocation3 [shape = 's32[1]{0}', space=sflag, size = 0x4, scoped, tag = 'scoped memory for tpu_custom_call.1']
    #allocation4 [shape = 's32[1]{0}', space=sflag, size = 0x4, scoped, tag = 'scoped memory for tpu_custom_call.1']
    #allocation5 [shape = 'u8[16384]{0}', space=vmem, size = 0x4000, scoped, tag = 'input window, operand 1, single buffered']
    #allocation6 [shape = 's32[1]{0}', space=sflag, size = 0x4, scoped, tag = 'scoped memory for tpu_custom_call.1']
    #allocation7 [shape = 'u8[393216]{0}', space=vmem, size = 0x60000, scoped, tag = 'input window, operand 3, single buffered']
    #allocation8 [shape = 'u8[196608]{0}', space=vmem, size = 0x30000, scoped, tag = 'input window, operand 5, single buffered']
    #allocation9 [shape = 's32[1]{0}', space=sflag, size = 0x4, scoped, tag = 'scoped memory for tpu_custom_call.1']
    #allocation10 [shape = 'u8[4096]{0}', space=vmem, size = 0x1000, scoped, tag = 'output window, operand 0, single buffered']
    %13 = vsyncpa [#allocation3], 0
    %14 = vsyncpa [#allocation6], 0
    %15 = vsyncpa [#allocation9], 0
    %16 = vsyncpa [#allocation4], 0
    // Predicated region
    $region2: #{tpu_custom_call.1} parent=1 // pred_check
      _
    $region3: #{tpu_custom_call.1} parent=1 // pred_check_branch
      %18 = sbr.rel (0) target = $region5
    $region4: #{tpu_custom_call.1} parent=1 // pred_region
      %s20 = ssub.s32 128, 128
      %21 = vsyncadd [#allocation3], %s20
      %s23 = sshll.u32 [#allocation2], 4
      %s24 = int_to_ptr.vmem [resolvable:$true] %s23
      %26 = dma.hbm_to_vmem [thread:$0]  %s0, 128, %s24, [#allocation3]
    $region5: #{tpu_custom_call.1} parent=1 // pred_fallthru
      _
    // Predicated region
    $region6: #{tpu_custom_call.1} parent=1 // pred_check
      _
    $region7: #{tpu_custom_call.1} parent=1 // pred_check_branch
      %28 = sbr.rel (0) target = $region9
    $region8: #{tpu_custom_call.1} parent=1 // pred_region
      %s30 = ssub.s32 512, 512
      %31 = vsyncadd [#allocation6], %s30
      %s32 = sshll.u32 [#allocation5], 4
      %s33 = int_to_ptr.vmem [resolvable:$true] %s32
      %38 = dma.hbm_to_vmem [thread:$0]  %s1, 512, %s33, [#allocation6], 256, 256, 16
    $region9: #{tpu_custom_call.1} parent=1 // pred_fallthru
      _
    // Predicated region
    $region10: #{tpu_custom_call.1} parent=1 // pred_check
      _
    $region11: #{tpu_custom_call.1} parent=1 // pred_check_branch
      %40 = sbr.rel (0) target = $region13
    $region12: #{tpu_custom_call.1} parent=1 // pred_region
      _
    $region13: #{tpu_custom_call.1} parent=1 // pred_fallthru
      _
    // Predicated region
    $region14: #{tpu_custom_call.1} parent=1 // pred_check
      _
    $region15: #{tpu_custom_call.1} parent=1 // pred_check_branch
      %42 = sbr.rel (0) target = $region17
    $region16: #{tpu_custom_call.1} parent=1 // pred_region
      %s44 = ssub.s32 12288, 12288
      %45 = vsyncadd [#allocation6], %s44
      %s46 = sshll.u32 [#allocation7], 4
      %s47 = int_to_ptr.vmem [resolvable:$true] %s46
      %52 = dma.hbm_to_vmem [thread:$0]  %s3, 12288, %s47, [#allocation6], 192, 192, 12
    $region17: #{tpu_custom_call.1} parent=1 // pred_fallthru
      _
    // Predicated region
    $region18: #{tpu_custom_call.1} parent=1 // pred_check
      _
    $region19: #{tpu_custom_call.1} parent=1 // pred_check_branch
      %54 = sbr.rel (0) target = $region21
    $region20: #{tpu_custom_call.1} parent=1 // pred_region
      _
    $region21: #{tpu_custom_call.1} parent=1 // pred_fallthru
      _
    // Predicated region
    $region22: #{tpu_custom_call.1} parent=1 // pred_check
      _
    $region23: #{tpu_custom_call.1} parent=1 // pred_check_branch
      %56 = sbr.rel (0) target = $region25
    $region24: #{tpu_custom_call.1} parent=1 // pred_region
      %s58 = ssub.s32 6144, 6144
      %59 = vsyncadd [#allocation9], %s58
      %s60 = sshll.u32 [#allocation8], 4
      %s61 = int_to_ptr.vmem [resolvable:$true] %s60
      %66 = dma.hbm_to_vmem [thread:$0]  %s5, 6144, %s61, [#allocation9], 128, 128, 8
    $region25: #{tpu_custom_call.1} parent=1 // pred_fallthru
      _
    // Predicated region
    $region26: #{tpu_custom_call.1} parent=1 // pred_check
      _
    $region27: #{tpu_custom_call.1} parent=1 // pred_check_branch
      %68 = sbr.rel (0) target = $region29
    $region28: #{tpu_custom_call.1} parent=1 // pred_region
      _
    $region29: #{tpu_custom_call.1} parent=1 // pred_fallthru
      _
    // Predicated region
    $region30: #{tpu_custom_call.1} parent=1 // pred_check
      _
    $region31: #{tpu_custom_call.1} parent=1 // pred_check_branch
      %70 = sbr.rel (0) target = $region33
    $region32: #{tpu_custom_call.1} parent=1 // pred_region
      _
    $region33: #{tpu_custom_call.1} parent=1 // pred_fallthru
      _
    // Predicated region
    $region34: #{tpu_custom_call.1} parent=1 // pred_check
      _
    $region35: #{tpu_custom_call.1} parent=1 // pred_check_branch
      %72 = sbr.rel (0) target = $region37
    $region36: #{tpu_custom_call.1} parent=1 // pred_region
      %73 = dma.done [#allocation3], 128
    $region37: #{tpu_custom_call.1} parent=1 // pred_fallthru
      _
    // Predicated region
    $region38: #{tpu_custom_call.1} parent=1 // pred_check
      _
    $region39: #{tpu_custom_call.1} parent=1 // pred_check_branch
      %75 = sbr.rel (0) target = $region41
    $region40: #{tpu_custom_call.1} parent=1 // pred_region
      %76 = dma.done [#allocation6], 512
    $region41: #{tpu_custom_call.1} parent=1 // pred_fallthru
      _
    // Predicated region
    $region42: #{tpu_custom_call.1} parent=1 // pred_check
      _
    $region43: #{tpu_custom_call.1} parent=1 // pred_check_branch
      %78 = sbr.rel (0) target = $region45
    $region44: #{tpu_custom_call.1} parent=1 // pred_region
      %79 = dma.done [#allocation6], 12288
    $region45: #{tpu_custom_call.1} parent=1 // pred_fallthru
      _
    // Predicated region
    $region46: #{tpu_custom_call.1} parent=1 // pred_check
      _
    $region47: #{tpu_custom_call.1} parent=1 // pred_check_branch
      %81 = sbr.rel (0) target = $region49
    $region48: #{tpu_custom_call.1} parent=1 // pred_region
      %82 = dma.done [#allocation9], 6144
    $region49: #{tpu_custom_call.1} parent=1 // pred_fallthru
      _
    %v84 = vld [vmem:[#allocation2] sm:$0xff]
    %v85 = vpack.c.bf16 %v84, %v84
    %v86 = vld [vmem:[#allocation5] sm:$0xff]
    %v87 = vld [vmem:[#allocation5 + $0x8] sm:$0xff]
    %v88 = vld [vmem:[#allocation5 + $0x10] sm:$0xff]
    %v89 = vld [vmem:[#allocation5 + $0x18] sm:$0xff]
    %v90 = vld [vmem:[%s2] sm:$0xf]
    %v92 = vlaneseq
    %v93 = vshrl.u32 %v92, 7
    %v94 = vsub.s32 0, %v93
    %v95 = vrot.slane %v90, %v94
    %v96 = vlaneseq
    %v97 = vshrl.u32 %v96, 7
    %v98 = vsub.s32 1, %v97
    %v99 = vrot.slane %v90, %v98
    %v100 = vlaneseq
    %v101 = vshrl.u32 %v100, 7
    %v102 = vsub.s32 2, %v101
    %v103 = vrot.slane %v90, %v102
    %v104 = vlaneseq
    %v105 = vshrl.u32 %v104, 7
    %v106 = vsub.s32 3, %v105
    %v107 = vrot.slane %v90, %v106
    %v116 = vunpack.c.l.b16 %v86
    %v117 = vunpack.c.h.b16 %v86
    %v118 = vunpack.c.l.b16 %v87
    %v119 = vunpack.c.h.b16 %v87
    %v120 = vunpack.c.l.b16 %v88
    %v121 = vunpack.c.h.b16 %v88
    %v122 = vunpack.c.l.b16 %v89
    %v123 = vunpack.c.h.b16 %v89
    %v124 = vpack.c.b16 %v120, %v116
    %v125 = vpack.c.b16 %v121, %v117
    %v126 = vpack.c.b16 %v122, %v118
    %v127 = vpack.c.b16 %v123, %v119
    %vm132 = vcmask 130048
    %v134 = vsel %vm132, %v85, 0
    %136 = vmatprep.subr.bf16.mxu0 %v125
    %137 = vmatpush1.bf16.msra.mxu0 %v124
    %138 = vmatprep.subr.bf16.mxu0 0
    %139 = vmatpush1.bf16.msra.mxu0 0
    %140 = vmatprep.subr.bf16.mxu0 0
    %141 = vmatpush1.bf16.msra.mxu0 0
    %142 = vmatprep.subr.bf16.mxu0 0
    %143 = vmatpush1.bf16.msra.mxu0 0
    %144 = vmatprep.subr.bf16.mxu0 0
    %145 = vmatpush1.bf16.msra.mxu0 0
    %146 = vmatprep.subr.bf16.mxu0 0
    %147 = vmatpush1.bf16.msra.mxu0 0
    %148 = vmatprep.subr.bf16.mxu0 0
    %149 = vmatpush1.bf16.msra.mxu0 0
    %150 = vmatprep.subr.bf16.mxu0 0
    %151 = vmatpush1.bf16.msra.mxu0 0
    %152 = vmatprep.subr.bf16.mxu0 0
    %153 = vmatpush1.bf16.msra.mxu0 0
    %154 = vmatprep.subr.bf16.mxu0 0
    %155 = vmatpush1.bf16.msra.mxu0 0
    %156 = vmatprep.subr.bf16.mxu0 0
    %157 = vmatpush1.bf16.msra.mxu0 0
    %158 = vmatprep.subr.bf16.mxu0 0
    %159 = vmatpush1.bf16.msra.mxu0 0
    %160 = vmatprep.subr.bf16.mxu0 0
    %161 = vmatpush1.bf16.msra.mxu0 0
    %162 = vmatprep.subr.bf16.mxu0 0
    %163 = vmatpush1.bf16.msra.mxu0 0
    %164 = vmatprep.subr.bf16.mxu0 0
    %165 = vmatpush1.bf16.msra.mxu0 0
    %166 = vmatprep.subr.bf16.mxu0 0
    %167 = vmatpush1.bf16.msra.mxu0 0
    %168 = vmatprep.mubr.bf16.mxu0 0
    %169 = vmatmul.mubr.bf16.gmra.mrb[0].mxu0 %v134
    %v170 = vpop.f32.mrb[0].mxu0
    %v171 = vadd.f32 %v95, %v170
    %v172 = vpop.f32.mrb[0].mxu0
    %v173 = vadd.f32 %v99, %v172
    %v174 = vpop.f32.mrb[0].mxu0
    %v175 = vpop.f32.mrb[0].mxu0
    %176 = vdwg.mxu0
    %177 = vmatprep.subr.bf16.mxu0 %v127
    %178 = vmatpush1.bf16.msra.mxu0 %v126
    %179 = vmatprep.subr.bf16.mxu0 0
    %180 = vmatpush1.bf16.msra.mxu0 0
    %181 = vmatprep.subr.bf16.mxu0 0
    %182 = vmatpush1.bf16.msra.mxu0 0
    %183 = vmatprep.subr.bf16.mxu0 0
    %184 = vmatpush1.bf16.msra.mxu0 0
    %185 = vmatprep.subr.bf16.mxu0 0
    %186 = vmatpush1.bf16.msra.mxu0 0
    %187 = vmatprep.subr.bf16.mxu0 0
    %188 = vmatpush1.bf16.msra.mxu0 0
    %189 = vmatprep.subr.bf16.mxu0 0
    %190 = vmatpush1.bf16.msra.mxu0 0
    %191 = vmatprep.subr.bf16.mxu0 0
    %192 = vmatpush1.bf16.msra.mxu0 0
    %193 = vmatprep.subr.bf16.mxu0 0
    %194 = vmatpush1.bf16.msra.mxu0 0
    %195 = vmatprep.subr.bf16.mxu0 0
    %196 = vmatpush1.bf16.msra.mxu0 0
    %197 = vmatprep.subr.bf16.mxu0 0
    %198 = vmatpush1.bf16.msra.mxu0 0
    %199 = vmatprep.subr.bf16.mxu0 0
    %200 = vmatpush1.bf16.msra.mxu0 0
    %201 = vmatprep.subr.bf16.mxu0 0
    %202 = vmatpush1.bf16.msra.mxu0 0
    %203 = vmatprep.subr.bf16.mxu0 0
    %204 = vmatpush1.bf16.msra.mxu0 0
    %205 = vmatprep.subr.bf16.mxu0 0
    %206 = vmatpush1.bf16.msra.mxu0 0
    %207 = vmatprep.subr.bf16.mxu0 0
    %208 = vmatpush1.bf16.msra.mxu0 0
    %209 = vmatprep.mubr.bf16.mxu0 0
    %210 = vmatmul.mubr.bf16.gmra.mrb[0].mxu0 %v134
    %v211 = vpop.f32.mrb[0].mxu0
    %v212 = vadd.f32 %v103, %v211
    %v213 = vpop.f32.mrb[0].mxu0
    %v214 = vadd.f32 %v107, %v213
    %v215 = vpop.f32.mrb[0].mxu0
    %v216 = vpop.f32.mrb[0].mxu0
    %217 = vdwg.mxu0
    %v218 = vmax.f32 %v171, 0.0
    %v219 = vmax.f32 %v173, 0.0
    %v220 = vmax.f32 %v212, 0.0
    %v221 = vmax.f32 %v214, 0.0
    %v222 = vpack.c.bf16 %v218, %v218
    %v223 = vpack.c.bf16 %v219, %v219
    %v224 = vpack.c.bf16 %v220, %v220
    %v225 = vpack.c.bf16 %v221, %v221
    %v226 = vld [vmem:[#allocation7] sm:$0xff]
    %v227 = vld [vmem:[#allocation7 + $0x8] sm:$0xf]
    %v228 = vld [vmem:[#allocation7 + $0xc] sm:$0xff]
    %v229 = vld [vmem:[#allocation7 + $0x14] sm:$0xf]
    %v230 = vld [vmem:[#allocation7 + $0x18] sm:$0xff]
    %v231 = vld [vmem:[#allocation7 + $0x20] sm:$0xf]
    %v232 = vld [vmem:[#allocation7 + $0x24] sm:$0xff]
    %v233 = vld [vmem:[#allocation7 + $0x2c] sm:$0xf]
    %v234 = vld [vmem:[#allocation7 + $0x30] sm:$0xff]
    %v235 = vld [vmem:[#allocation7 + $0x38] sm:$0xf]
    %v236 = vld [vmem:[#allocation7 + $0x3c] sm:$0xff]
    %v237 = vld [vmem:[#allocation7 + $0x44] sm:$0xf]
    %v238 = vld [vmem:[#allocation7 + $0x48] sm:$0xff]
    %v239 = vld [vmem:[#allocation7 + $0x50] sm:$0xf]
    %v240 = vld [vmem:[#allocation7 + $0x54] sm:$0xff]
    %v241 = vld [vmem:[#allocation7 + $0x5c] sm:$0xf]
    %v242 = vld [vmem:[#allocation7 + $0x60] sm:$0xff]
    %v243 = vld [vmem:[#allocation7 + $0x68] sm:$0xf]
    %v244 = vld [vmem:[#allocation7 + $0x6c] sm:$0xff]
    %v245 = vld [vmem:[#allocation7 + $0x74] sm:$0xf]
    %v246 = vld [vmem:[#allocation7 + $0x78] sm:$0xff]
    %v247 = vld [vmem:[#allocation7 + $0x80] sm:$0xf]
    %v248 = vld [vmem:[#allocation7 + $0x84] sm:$0xff]
    %v249 = vld [vmem:[#allocation7 + $0x8c] sm:$0xf]
    %v250 = vld [vmem:[#allocation7 + $0x90] sm:$0xff]
    %v251 = vld [vmem:[#allocation7 + $0x98] sm:$0xf]
    %v252 = vld [vmem:[#allocation7 + $0x9c] sm:$0xff]
    %v253 = vld [vmem:[#allocation7 + $0xa4] sm:$0xf]
    %v254 = vld [vmem:[#allocation7 + $0xa8] sm:$0xff]
    %v255 = vld [vmem:[#allocation7 + $0xb0] sm:$0xf]
    %v256 = vld [vmem:[#allocation7 + $0xb4] sm:$0xff]
    %v257 = vld [vmem:[#allocation7 + $0xbc] sm:$0xf]
    %v258 = vld [vmem:[#allocation7 + $0xc0] sm:$0xff]
    %v259 = vld [vmem:[#allocation7 + $0xc8] sm:$0xf]
    %v260 = vld [vmem:[#allocation7 + $0xcc] sm:$0xff]
    %v261 = vld [vmem:[#allocation7 + $0xd4] sm:$0xf]
    %v262 = vld [vmem:[#allocation7 + $0xd8] sm:$0xff]
    %v263 = vld [vmem:[#allocation7 + $0xe0] sm:$0xf]
    %v264 = vld [vmem:[#allocation7 + $0xe4] sm:$0xff]
    %v265 = vld [vmem:[#allocation7 + $0xec] sm:$0xf]
    %v266 = vld [vmem:[#allocation7 + $0xf0] sm:$0xff]
    %v267 = vld [vmem:[#allocation7 + $0xf8] sm:$0xf]
    %v268 = vld [vmem:[#allocation7 + $0xfc] sm:$0xff]
    %v269 = vld [vmem:[#allocation7 + $0x104] sm:$0xf]
    %v270 = vld [vmem:[#allocation7 + $0x108] sm:$0xff]
    %v271 = vld [vmem:[#allocation7 + $0x110] sm:$0xf]
    %v272 = vld [vmem:[#allocation7 + $0x114] sm:$0xff]
    %v273 = vld [vmem:[#allocation7 + $0x11c] sm:$0xf]
    %v274 = vld [vmem:[#allocation7 + $0x120] sm:$0xff]
    %v275 = vld [vmem:[#allocation7 + $0x128] sm:$0xf]
    %v276 = vld [vmem:[#allocation7 + $0x12c] sm:$0xff]
    %v277 = vld [vmem:[#allocation7 + $0x134] sm:$0xf]
    %v278 = vld [vmem:[#allocation7 + $0x138] sm:$0xff]
    %v279 = vld [vmem:[#allocation7 + $0x140] sm:$0xf]
    %v280 = vld [vmem:[#allocation7 + $0x144] sm:$0xff]
    %v281 = vld [vmem:[#allocation7 + $0x14c] sm:$0xf]
    %v282 = vld [vmem:[#allocation7 + $0x150] sm:$0xff]
    %v283 = vld [vmem:[#allocation7 + $0x158] sm:$0xf]
    %v284 = vld [vmem:[#allocation7 + $0x15c] sm:$0xff]
    %v285 = vld [vmem:[#allocation7 + $0x164] sm:$0xf]
    %v286 = vld [vmem:[#allocation7 + $0x168] sm:$0xff]
    %v287 = vld [vmem:[#allocation7 + $0x170] sm:$0xf]
    %v288 = vld [vmem:[#allocation7 + $0x174] sm:$0xff]
    %v289 = vld [vmem:[#allocation7 + $0x17c] sm:$0xf]
    %v290 = vld [vmem:[#allocation7 + $0x180] sm:$0xff]
    %v291 = vld [vmem:[#allocation7 + $0x188] sm:$0xf]
    %v292 = vld [vmem:[#allocation7 + $0x18c] sm:$0xff]
    %v293 = vld [vmem:[#allocation7 + $0x194] sm:$0xf]
    %v294 = vld [vmem:[#allocation7 + $0x198] sm:$0xff]
    %v295 = vld [vmem:[#allocation7 + $0x1a0] sm:$0xf]
    %v296 = vld [vmem:[#allocation7 + $0x1a4] sm:$0xff]
    %v297 = vld [vmem:[#allocation7 + $0x1ac] sm:$0xf]
    %v298 = vld [vmem:[#allocation7 + $0x1b0] sm:$0xff]
    %v299 = vld [vmem:[#allocation7 + $0x1b8] sm:$0xf]
    %v300 = vld [vmem:[#allocation7 + $0x1bc] sm:$0xff]
    %v301 = vld [vmem:[#allocation7 + $0x1c4] sm:$0xf]
    %v302 = vld [vmem:[#allocation7 + $0x1c8] sm:$0xff]
    %v303 = vld [vmem:[#allocation7 + $0x1d0] sm:$0xf]
    %v304 = vld [vmem:[#allocation7 + $0x1d4] sm:$0xff]
    %v305 = vld [vmem:[#allocation7 + $0x1dc] sm:$0xf]
    %v306 = vld [vmem:[#allocation7 + $0x1e0] sm:$0xff]
    %v307 = vld [vmem:[#allocation7 + $0x1e8] sm:$0xf]
    %v308 = vld [vmem:[#allocation7 + $0x1ec] sm:$0xff]
    %v309 = vld [vmem:[#allocation7 + $0x1f4] sm:$0xf]
    %v310 = vld [vmem:[#allocation7 + $0x1f8] sm:$0xff]
    %v311 = vld [vmem:[#allocation7 + $0x200] sm:$0xf]
    %v312 = vld [vmem:[#allocation7 + $0x204] sm:$0xff]
    %v313 = vld [vmem:[#allocation7 + $0x20c] sm:$0xf]
    %v314 = vld [vmem:[#allocation7 + $0x210] sm:$0xff]
    %v315 = vld [vmem:[#allocation7 + $0x218] sm:$0xf]
    %v316 = vld [vmem:[#allocation7 + $0x21c] sm:$0xff]
    %v317 = vld [vmem:[#allocation7 + $0x224] sm:$0xf]
    %v318 = vld [vmem:[#allocation7 + $0x228] sm:$0xff]
    %v319 = vld [vmem:[#allocation7 + $0x230] sm:$0xf]
    %v320 = vld [vmem:[#allocation7 + $0x234] sm:$0xff]
    %v321 = vld [vmem:[#allocation7 + $0x23c] sm:$0xf]
    %v322 = vld [vmem:[#allocation7 + $0x240] sm:$0xff]
    %v323 = vld [vmem:[#allocation7 + $0x248] sm:$0xf]
    %v324 = vld [vmem:[#allocation7 + $0x24c] sm:$0xff]
    %v325 = vld [vmem:[#allocation7 + $0x254] sm:$0xf]
    %v326 = vld [vmem:[#allocation7 + $0x258] sm:$0xff]
    %v327 = vld [vmem:[#allocation7 + $0x260] sm:$0xf]
    %v328 = vld [vmem:[#allocation7 + $0x264] sm:$0xff]
    %v329 = vld [vmem:[#allocation7 + $0x26c] sm:$0xf]
    %v330 = vld [vmem:[#allocation7 + $0x270] sm:$0xff]
    %v331 = vld [vmem:[#allocation7 + $0x278] sm:$0xf]
    %v332 = vld [vmem:[#allocation7 + $0x27c] sm:$0xff]
    %v333 = vld [vmem:[#allocation7 + $0x284] sm:$0xf]
    %v334 = vld [vmem:[#allocation7 + $0x288] sm:$0xff]
    %v335 = vld [vmem:[#allocation7 + $0x290] sm:$0xf]
    %v336 = vld [vmem:[#allocation7 + $0x294] sm:$0xff]
    %v337 = vld [vmem:[#allocation7 + $0x29c] sm:$0xf]
    %v338 = vld [vmem:[#allocation7 + $0x2a0] sm:$0xff]
    %v339 = vld [vmem:[#allocation7 + $0x2a8] sm:$0xf]
    %v340 = vld [vmem:[#allocation7 + $0x2ac] sm:$0xff]
    %v341 = vld [vmem:[#allocation7 + $0x2b4] sm:$0xf]
    %v342 = vld [vmem:[#allocation7 + $0x2b8] sm:$0xff]
    %v343 = vld [vmem:[#allocation7 + $0x2c0] sm:$0xf]
    %v344 = vld [vmem:[#allocation7 + $0x2c4] sm:$0xff]
    %v345 = vld [vmem:[#allocation7 + $0x2cc] sm:$0xf]
    %v346 = vld [vmem:[#allocation7 + $0x2d0] sm:$0xff]
    %v347 = vld [vmem:[#allocation7 + $0x2d8] sm:$0xf]
    %v348 = vld [vmem:[#allocation7 + $0x2dc] sm:$0xff]
    %v349 = vld [vmem:[#allocation7 + $0x2e4] sm:$0xf]
    %v350 = vld [vmem:[#allocation7 + $0x2e8] sm:$0xff]
    %v351 = vld [vmem:[#allocation7 + $0x2f0] sm:$0xf]
    %v352 = vld [vmem:[#allocation7 + $0x2f4] sm:$0xff]
    %v353 = vld [vmem:[#allocation7 + $0x2fc] sm:$0xf]
    %v354 = vld [vmem:[%s4] sm:$0x7]
    %v356 = vlaneseq
    %v357 = vshrl.u32 %v356, 7
    %v358 = vsub.s32 0, %v357
    %v359 = vrot.slane %v354, %v358
    %v360 = vlaneseq
    %v361 = vshrl.u32 %v360, 7
    %v362 = vsub.s32 1, %v361
    %v363 = vrot.slane %v354, %v362
    %v364 = vlaneseq
    %v365 = vshrl.u32 %v364, 7
    %v366 = vsub.s32 2, %v365
    %v367 = vrot.slane %v354, %v366
    %v499 = vunpack.c.l.b16 %v226
    %v500 = vunpack.c.h.b16 %v226
    %v501 = vunpack.c.l.b16 %v227
    %v502 = vunpack.c.l.b16 %v228
    %v503 = vunpack.c.h.b16 %v228
    %v504 = vunpack.c.l.b16 %v229
    %v505 = vunpack.c.l.b16 %v230
    %v506 = vunpack.c.h.b16 %v230
    %v507 = vunpack.c.l.b16 %v231
    %v508 = vunpack.c.l.b16 %v232
    %v509 = vunpack.c.h.b16 %v232
    %v510 = vunpack.c.l.b16 %v233
    %v511 = vunpack.c.l.b16 %v234
    %v512 = vunpack.c.h.b16 %v234
    %v513 = vunpack.c.l.b16 %v235
    %v514 = vunpack.c.l.b16 %v236
    %v515 = vunpack.c.h.b16 %v236
    %v516 = vunpack.c.l.b16 %v237
    %v517 = vunpack.c.l.b16 %v238
    %v518 = vunpack.c.h.b16 %v238
    %v519 = vunpack.c.l.b16 %v239
    %v520 = vunpack.c.l.b16 %v240
    %v521 = vunpack.c.h.b16 %v240
    %v522 = vunpack.c.l.b16 %v241
    %v523 = vunpack.c.l.b16 %v242
    %v524 = vunpack.c.h.b16 %v242
    %v525 = vunpack.c.l.b16 %v243
    %v526 = vunpack.c.l.b16 %v244
    %v527 = vunpack.c.h.b16 %v244
    %v528 = vunpack.c.l.b16 %v245
    %v529 = vunpack.c.l.b16 %v246
    %v530 = vunpack.c.h.b16 %v246
    %v531 = vunpack.c.l.b16 %v247
    %v532 = vunpack.c.l.b16 %v248
    %v533 = vunpack.c.h.b16 %v248
    %v534 = vunpack.c.l.b16 %v249
    %v535 = vunpack.c.l.b16 %v250
    %v536 = vunpack.c.h.b16 %v250
    %v537 = vunpack.c.l.b16 %v251
    %v538 = vunpack.c.l.b16 %v252
    %v539 = vunpack.c.h.b16 %v252
    %v540 = vunpack.c.l.b16 %v253
    %v541 = vunpack.c.l.b16 %v254
    %v542 = vunpack.c.h.b16 %v254
    %v543 = vunpack.c.l.b16 %v255
    %v544 = vunpack.c.l.b16 %v256
    %v545 = vunpack.c.h.b16 %v256
    %v546 = vunpack.c.l.b16 %v257
    %v547 = vunpack.c.l.b16 %v258
    %v548 = vunpack.c.h.b16 %v258
    %v549 = vunpack.c.l.b16 %v259
    %v550 = vunpack.c.l.b16 %v260
    %v551 = vunpack.c.h.b16 %v260
    %v552 = vunpack.c.l.b16 %v261
    %v553 = vunpack.c.l.b16 %v262
    %v554 = vunpack.c.h.b16 %v262
    %v555 = vunpack.c.l.b16 %v263
    %v556 = vunpack.c.l.b16 %v264
    %v557 = vunpack.c.h.b16 %v264
    %v558 = vunpack.c.l.b16 %v265
    %v559 = vunpack.c.l.b16 %v266
    %v560 = vunpack.c.h.b16 %v266
    %v561 = vunpack.c.l.b16 %v267
    %v562 = vunpack.c.l.b16 %v268
    %v563 = vunpack.c.h.b16 %v268
    %v564 = vunpack.c.l.b16 %v269
    %v565 = vunpack.c.l.b16 %v270
    %v566 = vunpack.c.h.b16 %v270
    %v567 = vunpack.c.l.b16 %v271
    %v568 = vunpack.c.l.b16 %v272
    %v569 = vunpack.c.h.b16 %v272
    %v570 = vunpack.c.l.b16 %v273
    %v571 = vunpack.c.l.b16 %v274
    %v572 = vunpack.c.h.b16 %v274
    %v573 = vunpack.c.l.b16 %v275
    %v574 = vunpack.c.l.b16 %v276
    %v575 = vunpack.c.h.b16 %v276
    %v576 = vunpack.c.l.b16 %v277
    %v577 = vunpack.c.l.b16 %v278
    %v578 = vunpack.c.h.b16 %v278
    %v579 = vunpack.c.l.b16 %v279
    %v580 = vunpack.c.l.b16 %v280
    %v581 = vunpack.c.h.b16 %v280
    %v582 = vunpack.c.l.b16 %v281
    %v583 = vunpack.c.l.b16 %v282
    %v584 = vunpack.c.h.b16 %v282
    %v585 = vunpack.c.l.b16 %v283
    %v586 = vunpack.c.l.b16 %v284
    %v587 = vunpack.c.h.b16 %v284
    %v588 = vunpack.c.l.b16 %v285
    %v589 = vunpack.c.l.b16 %v286
    %v590 = vunpack.c.h.b16 %v286
    %v591 = vunpack.c.l.b16 %v287
    %v592 = vunpack.c.l.b16 %v288
    %v593 = vunpack.c.h.b16 %v288
    %v594 = vunpack.c.l.b16 %v289
    %v595 = vunpack.c.l.b16 %v290
    %v596 = vunpack.c.h.b16 %v290
    %v597 = vunpack.c.l.b16 %v291
    %v598 = vunpack.c.l.b16 %v292
    %v599 = vunpack.c.h.b16 %v292
    %v600 = vunpack.c.l.b16 %v293
    %v601 = vunpack.c.l.b16 %v294
    %v602 = vunpack.c.h.b16 %v294
    %v603 = vunpack.c.l.b16 %v295
    %v604 = vunpack.c.l.b16 %v296
    %v605 = vunpack.c.h.b16 %v296
    %v606 = vunpack.c.l.b16 %v297
    %v607 = vunpack.c.l.b16 %v298
    %v608 = vunpack.c.h.b16 %v298
    %v609 = vunpack.c.l.b16 %v299
    %v610 = vunpack.c.l.b16 %v300
    %v611 = vunpack.c.h.b16 %v300
    %v612 = vunpack.c.l.b16 %v301
    %v613 = vunpack.c.l.b16 %v302
    %v614 = vunpack.c.h.b16 %v302
    %v615 = vunpack.c.l.b16 %v303
    %v616 = vunpack.c.l.b16 %v304
    %v617 = vunpack.c.h.b16 %v304
    %v618 = vunpack.c.l.b16 %v305
    %v619 = vunpack.c.l.b16 %v306
    %v620 = vunpack.c.h.b16 %v306
    %v621 = vunpack.c.l.b16 %v307
    %v622 = vunpack.c.l.b16 %v308
    %v623 = vunpack.c.h.b16 %v308
    %v624 = vunpack.c.l.b16 %v309
    %v625 = vunpack.c.l.b16 %v310
    %v626 = vunpack.c.h.b16 %v310
    %v627 = vunpack.c.l.b16 %v311
    %v628 = vunpack.c.l.b16 %v312
    %v629 = vunpack.c.h.b16 %v312
    %v630 = vunpack.c.l.b16 %v313
    %v631 = vunpack.c.l.b16 %v314
    %v632 = vunpack.c.h.b16 %v314
    %v633 = vunpack.c.l.b16 %v315
    %v634 = vunpack.c.l.b16 %v316
    %v635 = vunpack.c.h.b16 %v316
    %v636 = vunpack.c.l.b16 %v317
    %v637 = vunpack.c.l.b16 %v318
    %v638 = vunpack.c.h.b16 %v318
    %v639 = vunpack.c.l.b16 %v319
    %v640 = vunpack.c.l.b16 %v320
    %v641 = vunpack.c.h.b16 %v320
    %v642 = vunpack.c.l.b16 %v321
    %v643 = vunpack.c.l.b16 %v322
    %v644 = vunpack.c.h.b16 %v322
    %v645 = vunpack.c.l.b16 %v323
    %v646 = vunpack.c.l.b16 %v324
    %v647 = vunpack.c.h.b16 %v324
    %v648 = vunpack.c.l.b16 %v325
    %v649 = vunpack.c.l.b16 %v326
    %v650 = vunpack.c.h.b16 %v326
    %v651 = vunpack.c.l.b16 %v327
    %v652 = vunpack.c.l.b16 %v328
    %v653 = vunpack.c.h.b16 %v328
    %v654 = vunpack.c.l.b16 %v329
    %v655 = vunpack.c.l.b16 %v330
    %v656 = vunpack.c.h.b16 %v330
    %v657 = vunpack.c.l.b16 %v331
    %v658 = vunpack.c.l.b16 %v332
    %v659 = vunpack.c.h.b16 %v332
    %v660 = vunpack.c.l.b16 %v333
    %v661 = vunpack.c.l.b16 %v334
    %v662 = vunpack.c.h.b16 %v334
    %v663 = vunpack.c.l.b16 %v335
    %v664 = vunpack.c.l.b16 %v336
    %v665 = vunpack.c.h.b16 %v336
    %v666 = vunpack.c.l.b16 %v337
    %v667 = vunpack.c.l.b16 %v338
    %v668 = vunpack.c.h.b16 %v338
    %v669 = vunpack.c.l.b16 %v339
    %v670 = vunpack.c.l.b16 %v340
    %v671 = vunpack.c.h.b16 %v340
    %v672 = vunpack.c.l.b16 %v341
    %v673 = vunpack.c.l.b16 %v342
    %v674 = vunpack.c.h.b16 %v342
    %v675 = vunpack.c.l.b16 %v343
    %v676 = vunpack.c.l.b16 %v344
    %v677 = vunpack.c.h.b16 %v344
    %v678 = vunpack.c.l.b16 %v345
    %v679 = vunpack.c.l.b16 %v346
    %v680 = vunpack.c.h.b16 %v346
    %v681 = vunpack.c.l.b16 %v347
    %v682 = vunpack.c.l.b16 %v348
    %v683 = vunpack.c.h.b16 %v348
    %v684 = vunpack.c.l.b16 %v349
    %v685 = vunpack.c.l.b16 %v350
    %v686 = vunpack.c.h.b16 %v350
    %v687 = vunpack.c.l.b16 %v351
    %v688 = vunpack.c.l.b16 %v352
    %v689 = vunpack.c.h.b16 %v352
    %v690 = vunpack.c.l.b16 %v353
    %v691 = vpack.c.b16 %v502, %v499
    %v692 = vpack.c.b16 %v503, %v500
    %v693 = vpack.c.b16 %v504, %v501
    %v694 = vpack.c.b16 %v508, %v505
    %v695 = vpack.c.b16 %v509, %v506
    %v696 = vpack.c.b16 %v510, %v507
    %v697 = vpack.c.b16 %v514, %v511
    %v698 = vpack.c.b16 %v515, %v512
    %v699 = vpack.c.b16 %v516, %v513
    %v700 = vpack.c.b16 %v520, %v517
    %v701 = vpack.c.b16 %v521, %v518
    %v702 = vpack.c.b16 %v522, %v519
    %v703 = vpack.c.b16 %v526, %v523
    %v704 = vpack.c.b16 %v527, %v524
    %v705 = vpack.c.b16 %v528, %v525
    %v706 = vpack.c.b16 %v532, %v529
    %v707 = vpack.c.b16 %v533, %v530
    %v708 = vpack.c.b16 %v534, %v531
    %v709 = vpack.c.b16 %v538, %v535
    %v710 = vpack.c.b16 %v539, %v536
    %v711 = vpack.c.b16 %v540, %v537
    %v712 = vpack.c.b16 %v544, %v541
    %v713 = vpack.c.b16 %v545, %v542
    %v714 = vpack.c.b16 %v546, %v543
    %v715 = vpack.c.b16 %v550, %v547
    %v716 = vpack.c.b16 %v551, %v548
    %v717 = vpack.c.b16 %v552, %v549
    %v718 = vpack.c.b16 %v556, %v553
    %v719 = vpack.c.b16 %v557, %v554
    %v720 = vpack.c.b16 %v558, %v555
    %v721 = vpack.c.b16 %v562, %v559
    %v722 = vpack.c.b16 %v563, %v560
    %v723 = vpack.c.b16 %v564, %v561
    %v724 = vpack.c.b16 %v568, %v565
    %v725 = vpack.c.b16 %v569, %v566
    %v726 = vpack.c.b16 %v570, %v567
    %v727 = vpack.c.b16 %v574, %v571
    %v728 = vpack.c.b16 %v575, %v572
    %v729 = vpack.c.b16 %v576, %v573
    %v730 = vpack.c.b16 %v580, %v577
    %v731 = vpack.c.b16 %v581, %v578
    %v732 = vpack.c.b16 %v582, %v579
    %v733 = vpack.c.b16 %v586, %v583
    %v734 = vpack.c.b16 %v587, %v584
    %v735 = vpack.c.b16 %v588, %v585
    %v736 = vpack.c.b16 %v592, %v589
    %v737 = vpack.c.b16 %v593, %v590
    %v738 = vpack.c.b16 %v594, %v591
    %v739 = vpack.c.b16 %v598, %v595
    %v740 = vpack.c.b16 %v599, %v596
    %v741 = vpack.c.b16 %v600, %v597
    %v742 = vpack.c.b16 %v604, %v601
    %v743 = vpack.c.b16 %v605, %v602
    %v744 = vpack.c.b16 %v606, %v603
    %v745 = vpack.c.b16 %v610, %v607
    %v746 = vpack.c.b16 %v611, %v608
    %v747 = vpack.c.b16 %v612, %v609
    %v748 = vpack.c.b16 %v616, %v613
    %v749 = vpack.c.b16 %v617, %v614
    %v750 = vpack.c.b16 %v618, %v615
    %v751 = vpack.c.b16 %v622, %v619
    %v752 = vpack.c.b16 %v623, %v620
    %v753 = vpack.c.b16 %v624, %v621
    %v754 = vpack.c.b16 %v628, %v625
    %v755 = vpack.c.b16 %v629, %v626
    %v756 = vpack.c.b16 %v630, %v627
    %v757 = vpack.c.b16 %v634, %v631
    %v758 = vpack.c.b16 %v635, %v632
    %v759 = vpack.c.b16 %v636, %v633
    %v760 = vpack.c.b16 %v640, %v637
    %v761 = vpack.c.b16 %v641, %v638
    %v762 = vpack.c.b16 %v642, %v639
    %v763 = vpack.c.b16 %v646, %v643
    %v764 = vpack.c.b16 %v647, %v644
    %v765 = vpack.c.b16 %v648, %v645
    %v766 = vpack.c.b16 %v652, %v649
    %v767 = vpack.c.b16 %v653, %v650
    %v768 = vpack.c.b16 %v654, %v651
    %v769 = vpack.c.b16 %v658, %v655
    %v770 = vpack.c.b16 %v659, %v656
    %v771 = vpack.c.b16 %v660, %v657
    %v772 = vpack.c.b16 %v664, %v661
    %v773 = vpack.c.b16 %v665, %v662
    %v774 = vpack.c.b16 %v666, %v663
    %v775 = vpack.c.b16 %v670, %v667
    %v776 = vpack.c.b16 %v671, %v668
    %v777 = vpack.c.b16 %v672, %v669
    %v778 = vpack.c.b16 %v676, %v673
    %v779 = vpack.c.b16 %v677, %v674
    %v780 = vpack.c.b16 %v678, %v675
    %v781 = vpack.c.b16 %v682, %v679
    %v782 = vpack.c.b16 %v683, %v680
    %v783 = vpack.c.b16 %v684, %v681
    %v784 = vpack.c.b16 %v688, %v685
    %v785 = vpack.c.b16 %v689, %v686
    %v786 = vpack.c.b16 %v690, %v687
    %883 = vmatprep.subr.bf16.mxu0 %v692
    %884 = vmatpush1.bf16.msra.mxu0 %v691
    %885 = vmatprep.subr.bf16.mxu0 %v695
    %886 = vmatpush1.bf16.msra.mxu0 %v694
    %887 = vmatprep.subr.bf16.mxu0 %v698
    %888 = vmatpush1.bf16.msra.mxu0 %v697
    %889 = vmatprep.subr.bf16.mxu0 %v701
    %890 = vmatpush1.bf16.msra.mxu0 %v700
    %891 = vmatprep.subr.bf16.mxu0 %v704
    %892 = vmatpush1.bf16.msra.mxu0 %v703
    %893 = vmatprep.subr.bf16.mxu0 %v707
    %894 = vmatpush1.bf16.msra.mxu0 %v706
    %895 = vmatprep.subr.bf16.mxu0 %v710
    %896 = vmatpush1.bf16.msra.mxu0 %v709
    %897 = vmatprep.subr.bf16.mxu0 %v713
    %898 = vmatpush1.bf16.msra.mxu0 %v712
    %899 = vmatprep.subr.bf16.mxu0 %v716
    %900 = vmatpush1.bf16.msra.mxu0 %v715
    %901 = vmatprep.subr.bf16.mxu0 %v719
    %902 = vmatpush1.bf16.msra.mxu0 %v718
    %903 = vmatprep.subr.bf16.mxu0 %v722
    %904 = vmatpush1.bf16.msra.mxu0 %v721
    %905 = vmatprep.subr.bf16.mxu0 %v725
    %906 = vmatpush1.bf16.msra.mxu0 %v724
    %907 = vmatprep.subr.bf16.mxu0 %v728
    %908 = vmatpush1.bf16.msra.mxu0 %v727
    %909 = vmatprep.subr.bf16.mxu0 %v731
    %910 = vmatpush1.bf16.msra.mxu0 %v730
    %911 = vmatprep.subr.bf16.mxu0 %v734
    %912 = vmatpush1.bf16.msra.mxu0 %v733
    %913 = vmatprep.subr.bf16.mxu0 %v737
    %914 = vmatpush1.bf16.msra.mxu0 %v736
    %915 = vmatprep.mubr.bf16.mxu0 %v223
    %916 = vmatmul.mubr.bf16.gmra.mrb[0].mxu0 %v222
    %v917 = vpop.f32.mrb[0].mxu0
    %v918 = vadd.f32 %v359, %v917
    %v919 = vpop.f32.mrb[0].mxu0
    %v920 = vadd.f32 %v363, %v919
    %v921 = vpop.f32.mrb[0].mxu0
    %v922 = vpop.f32.mrb[0].mxu0
    %923 = vdwg.mxu0
    %924 = vmatprep.subr.bf16.mxu0 %v740
    %925 = vmatpush1.bf16.msra.mxu0 %v739
    %926 = vmatprep.subr.bf16.mxu0 %v743
    %927 = vmatpush1.bf16.msra.mxu0 %v742
    %928 = vmatprep.subr.bf16.mxu0 %v746
    %929 = vmatpush1.bf16.msra.mxu0 %v745
    %930 = vmatprep.subr.bf16.mxu0 %v749
    %931 = vmatpush1.bf16.msra.mxu0 %v748
    %932 = vmatprep.subr.bf16.mxu0 %v752
    %933 = vmatpush1.bf16.msra.mxu0 %v751
    %934 = vmatprep.subr.bf16.mxu0 %v755
    %935 = vmatpush1.bf16.msra.mxu0 %v754
    %936 = vmatprep.subr.bf16.mxu0 %v758
    %937 = vmatpush1.bf16.msra.mxu0 %v757
    %938 = vmatprep.subr.bf16.mxu0 %v761
    %939 = vmatpush1.bf16.msra.mxu0 %v760
    %940 = vmatprep.subr.bf16.mxu0 %v764
    %941 = vmatpush1.bf16.msra.mxu0 %v763
    %942 = vmatprep.subr.bf16.mxu0 %v767
    %943 = vmatpush1.bf16.msra.mxu0 %v766
    %944 = vmatprep.subr.bf16.mxu0 %v770
    %945 = vmatpush1.bf16.msra.mxu0 %v769
    %946 = vmatprep.subr.bf16.mxu0 %v773
    %947 = vmatpush1.bf16.msra.mxu0 %v772
    %948 = vmatprep.subr.bf16.mxu0 %v776
    %949 = vmatpush1.bf16.msra.mxu0 %v775
    %950 = vmatprep.subr.bf16.mxu0 %v779
    %951 = vmatpush1.bf16.msra.mxu0 %v778
    %952 = vmatprep.subr.bf16.mxu0 %v782
    %953 = vmatpush1.bf16.msra.mxu0 %v781
    %954 = vmatprep.subr.bf16.mxu0 %v785
    %955 = vmatpush1.bf16.msra.mxu0 %v784
    %956 = vmatprep.mubr.bf16.mxu0 %v225
    %957 = vmatmul.mubr.bf16.gmra.mrb[0].mxu0 %v224
    %v958 = vpop.f32.mrb[0].mxu0
    %v959 = vadd.f32 %v918, %v958
    %v960 = vpop.f32.mrb[0].mxu0
    %v961 = vadd.f32 %v920, %v960
    %v962 = vpop.f32.mrb[0].mxu0
    %v963 = vpop.f32.mrb[0].mxu0
    %964 = vdwg.mxu0
    %965 = vmatprep.subr.bf16.mxu0 0
    %966 = vmatpush1.bf16.msra.mxu0 %v693
    %967 = vmatprep.subr.bf16.mxu0 0
    %968 = vmatpush1.bf16.msra.mxu0 %v696
    %969 = vmatprep.subr.bf16.mxu0 0
    %970 = vmatpush1.bf16.msra.mxu0 %v699
    %971 = vmatprep.subr.bf16.mxu0 0
    %972 = vmatpush1.bf16.msra.mxu0 %v702
    %973 = vmatprep.subr.bf16.mxu0 0
    %974 = vmatpush1.bf16.msra.mxu0 %v705
    %975 = vmatprep.subr.bf16.mxu0 0
    %976 = vmatpush1.bf16.msra.mxu0 %v708
    %977 = vmatprep.subr.bf16.mxu0 0
    %978 = vmatpush1.bf16.msra.mxu0 %v711
    %979 = vmatprep.subr.bf16.mxu0 0
    %980 = vmatpush1.bf16.msra.mxu0 %v714
    %981 = vmatprep.subr.bf16.mxu0 0
    %982 = vmatpush1.bf16.msra.mxu0 %v717
    %983 = vmatprep.subr.bf16.mxu0 0
    %984 = vmatpush1.bf16.msra.mxu0 %v720
    %985 = vmatprep.subr.bf16.mxu0 0
    %986 = vmatpush1.bf16.msra.mxu0 %v723
    %987 = vmatprep.subr.bf16.mxu0 0
    %988 = vmatpush1.bf16.msra.mxu0 %v726
    %989 = vmatprep.subr.bf16.mxu0 0
    %990 = vmatpush1.bf16.msra.mxu0 %v729
    %991 = vmatprep.subr.bf16.mxu0 0
    %992 = vmatpush1.bf16.msra.mxu0 %v732
    %993 = vmatprep.subr.bf16.mxu0 0
    %994 = vmatpush1.bf16.msra.mxu0 %v735
    %995 = vmatprep.subr.bf16.mxu0 0
    %996 = vmatpush1.bf16.msra.mxu0 %v738
    %997 = vmatprep.mubr.bf16.mxu0 %v223
    %998 = vmatmul.mubr.bf16.gmra.mrb[0].mxu0 %v222
    %v999 = vpop.f32.mrb[0].mxu0
    %v1000 = vadd.f32 %v367, %v999
    %v1001 = vpop.f32.mrb[0].mxu0
    %v1002 = vpop.f32.mrb[0].mxu0
    %v1003 = vpop.f32.mrb[0].mxu0
    %1004 = vdwg.mxu0
    %1005 = vmatprep.subr.bf16.mxu0 0
    %1006 = vmatpush1.bf16.msra.mxu0 %v741
    %1007 = vmatprep.subr.bf16.mxu0 0
    %1008 = vmatpush1.bf16.msra.mxu0 %v744
    %1009 = vmatprep.subr.bf16.mxu0 0
    %1010 = vmatpush1.bf16.msra.mxu0 %v747
    %1011 = vmatprep.subr.bf16.mxu0 0
    %1012 = vmatpush1.bf16.msra.mxu0 %v750
    %1013 = vmatprep.subr.bf16.mxu0 0
    %1014 = vmatpush1.bf16.msra.mxu0 %v753
    %1015 = vmatprep.subr.bf16.mxu0 0
    %1016 = vmatpush1.bf16.msra.mxu0 %v756
    %1017 = vmatprep.subr.bf16.mxu0 0
    %1018 = vmatpush1.bf16.msra.mxu0 %v759
    %1019 = vmatprep.subr.bf16.mxu0 0
    %1020 = vmatpush1.bf16.msra.mxu0 %v762
    %1021 = vmatprep.subr.bf16.mxu0 0
    %1022 = vmatpush1.bf16.msra.mxu0 %v765
    %1023 = vmatprep.subr.bf16.mxu0 0
    %1024 = vmatpush1.bf16.msra.mxu0 %v768
    %1025 = vmatprep.subr.bf16.mxu0 0
    %1026 = vmatpush1.bf16.msra.mxu0 %v771
    %1027 = vmatprep.subr.bf16.mxu0 0
    %1028 = vmatpush1.bf16.msra.mxu0 %v774
    %1029 = vmatprep.subr.bf16.mxu0 0
    %1030 = vmatpush1.bf16.msra.mxu0 %v777
    %1031 = vmatprep.subr.bf16.mxu0 0
    %1032 = vmatpush1.bf16.msra.mxu0 %v780
    %1033 = vmatprep.subr.bf16.mxu0 0
    %1034 = vmatpush1.bf16.msra.mxu0 %v783
    %1035 = vmatprep.subr.bf16.mxu0 0
    %1036 = vmatpush1.bf16.msra.mxu0 %v786
    %1037 = vmatprep.mubr.bf16.mxu0 %v225
    %1038 = vmatmul.mubr.bf16.gmra.mrb[0].mxu0 %v224
    %v1039 = vpop.f32.mrb[0].mxu0
    %v1040 = vadd.f32 %v1000, %v1039
    %v1041 = vpop.f32.mrb[0].mxu0
    %v1042 = vpop.f32.mrb[0].mxu0
    %v1043 = vpop.f32.mrb[0].mxu0
    %1044 = vdwg.mxu0
    %v1045 = vmax.f32 %v959, 0.0
    %v1046 = vmax.f32 %v961, 0.0
    %v1047 = vmax.f32 %v1040, 0.0
    %v1048 = vpack.c.bf16 %v1045, %v1045
    %v1049 = vpack.c.bf16 %v1046, %v1046
    %v1050 = vpack.c.bf16 %v1047, %v1047
    %v1051 = vld [vmem:[#allocation8] sm:$0xff]
    %v1052 = vld [vmem:[#allocation8 + $0x8] sm:$0xff]
    %v1053 = vld [vmem:[#allocation8 + $0x10] sm:$0xff]
    %v1054 = vld [vmem:[#allocation8 + $0x18] sm:$0xff]
    %v1055 = vld [vmem:[#allocation8 + $0x20] sm:$0xff]
    %v1056 = vld [vmem:[#allocation8 + $0x28] sm:$0xff]
    %v1057 = vld [vmem:[#allocation8 + $0x30] sm:$0xff]
    %v1058 = vld [vmem:[#allocation8 + $0x38] sm:$0xff]
    %v1059 = vld [vmem:[#allocation8 + $0x40] sm:$0xff]
    %v1060 = vld [vmem:[#allocation8 + $0x48] sm:$0xff]
    %v1061 = vld [vmem:[#allocation8 + $0x50] sm:$0xff]
    %v1062 = vld [vmem:[#allocation8 + $0x58] sm:$0xff]
    %v1063 = vld [vmem:[#allocation8 + $0x60] sm:$0xff]
    %v1064 = vld [vmem:[#allocation8 + $0x68] sm:$0xff]
    %v1065 = vld [vmem:[#allocation8 + $0x70] sm:$0xff]
    %v1066 = vld [vmem:[#allocation8 + $0x78] sm:$0xff]
    %v1067 = vld [vmem:[#allocation8 + $0x80] sm:$0xff]
    %v1068 = vld [vmem:[#allocation8 + $0x88] sm:$0xff]
    %v1069 = vld [vmem:[#allocation8 + $0x90] sm:$0xff]
    %v1070 = vld [vmem:[#allocation8 + $0x98] sm:$0xff]
    %v1071 = vld [vmem:[#allocation8 + $0xa0] sm:$0xff]
    %v1072 = vld [vmem:[#allocation8 + $0xa8] sm:$0xff]
    %v1073 = vld [vmem:[#allocation8 + $0xb0] sm:$0xff]
    %v1074 = vld [vmem:[#allocation8 + $0xb8] sm:$0xff]
    %v1075 = vld [vmem:[#allocation8 + $0xc0] sm:$0xff]
    %v1076 = vld [vmem:[#allocation8 + $0xc8] sm:$0xff]
    %v1077 = vld [vmem:[#allocation8 + $0xd0] sm:$0xff]
    %v1078 = vld [vmem:[#allocation8 + $0xd8] sm:$0xff]
    %v1079 = vld [vmem:[#allocation8 + $0xe0] sm:$0xff]
    %v1080 = vld [vmem:[#allocation8 + $0xe8] sm:$0xff]
    %v1081 = vld [vmem:[#allocation8 + $0xf0] sm:$0xff]
    %v1082 = vld [vmem:[#allocation8 + $0xf8] sm:$0xff]
    %v1083 = vld [vmem:[#allocation8 + $0x100] sm:$0xff]
    %v1084 = vld [vmem:[#allocation8 + $0x108] sm:$0xff]
    %v1085 = vld [vmem:[#allocation8 + $0x110] sm:$0xff]
    %v1086 = vld [vmem:[#allocation8 + $0x118] sm:$0xff]
    %v1087 = vld [vmem:[#allocation8 + $0x120] sm:$0xff]
    %v1088 = vld [vmem:[#allocation8 + $0x128] sm:$0xff]
    %v1089 = vld [vmem:[#allocation8 + $0x130] sm:$0xff]
    %v1090 = vld [vmem:[#allocation8 + $0x138] sm:$0xff]
    %v1091 = vld [vmem:[#allocation8 + $0x140] sm:$0xff]
    %v1092 = vld [vmem:[#allocation8 + $0x148] sm:$0xff]
    %v1093 = vld [vmem:[#allocation8 + $0x150] sm:$0xff]
    %v1094 = vld [vmem:[#allocation8 + $0x158] sm:$0xff]
    %v1095 = vld [vmem:[#allocation8 + $0x160] sm:$0xff]
    %v1096 = vld [vmem:[#allocation8 + $0x168] sm:$0xff]
    %v1097 = vld [vmem:[#allocation8 + $0x170] sm:$0xff]
    %v1098 = vld [vmem:[#allocation8 + $0x178] sm:$0xff]
    %v1099 = vld [vmem:[%s6] sm:$0x3]
    %v1101 = vlaneseq
    %v1102 = vshrl.u32 %v1101, 7
    %v1103 = vsub.s32 0, %v1102
    %v1104 = vrot.slane %v1099, %v1103
    %v1105 = vlaneseq
    %v1106 = vshrl.u32 %v1105, 7
    %v1107 = vsub.s32 1, %v1106
    %v1108 = vrot.slane %v1099, %v1107
    %v1159 = vunpack.c.l.b16 %v1051
    %v1160 = vunpack.c.h.b16 %v1051
    %v1161 = vunpack.c.l.b16 %v1052
    %v1162 = vunpack.c.h.b16 %v1052
    %v1163 = vunpack.c.l.b16 %v1053
    %v1164 = vunpack.c.h.b16 %v1053
    %v1165 = vunpack.c.l.b16 %v1054
    %v1166 = vunpack.c.h.b16 %v1054
    %v1167 = vunpack.c.l.b16 %v1055
    %v1168 = vunpack.c.h.b16 %v1055
    %v1169 = vunpack.c.l.b16 %v1056
    %v1170 = vunpack.c.h.b16 %v1056
    %v1171 = vunpack.c.l.b16 %v1057
    %v1172 = vunpack.c.h.b16 %v1057
    %v1173 = vunpack.c.l.b16 %v1058
    %v1174 = vunpack.c.h.b16 %v1058
    %v1175 = vunpack.c.l.b16 %v1059
    %v1176 = vunpack.c.h.b16 %v1059
    %v1177 = vunpack.c.l.b16 %v1060
    %v1178 = vunpack.c.h.b16 %v1060
    %v1179 = vunpack.c.l.b16 %v1061
    %v1180 = vunpack.c.h.b16 %v1061
    %v1181 = vunpack.c.l.b16 %v1062
    %v1182 = vunpack.c.h.b16 %v1062
    %v1183 = vunpack.c.l.b16 %v1063
    %v1184 = vunpack.c.h.b16 %v1063
    %v1185 = vunpack.c.l.b16 %v1064
    %v1186 = vunpack.c.h.b16 %v1064
    %v1187 = vunpack.c.l.b16 %v1065
    %v1188 = vunpack.c.h.b16 %v1065
    %v1189 = vunpack.c.l.b16 %v1066
    %v1190 = vunpack.c.h.b16 %v1066
    %v1191 = vunpack.c.l.b16 %v1067
    %v1192 = vunpack.c.h.b16 %v1067
    %v1193 = vunpack.c.l.b16 %v1068
    %v1194 = vunpack.c.h.b16 %v1068
    %v1195 = vunpack.c.l.b16 %v1069
    %v1196 = vunpack.c.h.b16 %v1069
    %v1197 = vunpack.c.l.b16 %v1070
    %v1198 = vunpack.c.h.b16 %v1070
    %v1199 = vunpack.c.l.b16 %v1071
    %v1200 = vunpack.c.h.b16 %v1071
    %v1201 = vunpack.c.l.b16 %v1072
    %v1202 = vunpack.c.h.b16 %v1072
    %v1203 = vunpack.c.l.b16 %v1073
    %v1204 = vunpack.c.h.b16 %v1073
    %v1205 = vunpack.c.l.b16 %v1074
    %v1206 = vunpack.c.h.b16 %v1074
    %v1207 = vunpack.c.l.b16 %v1075
    %v1208 = vunpack.c.h.b16 %v1075
    %v1209 = vunpack.c.l.b16 %v1076
    %v1210 = vunpack.c.h.b16 %v1076
    %v1211 = vunpack.c.l.b16 %v1077
    %v1212 = vunpack.c.h.b16 %v1077
    %v1213 = vunpack.c.l.b16 %v1078
    %v1214 = vunpack.c.h.b16 %v1078
    %v1215 = vunpack.c.l.b16 %v1079
    %v1216 = vunpack.c.h.b16 %v1079
    %v1217 = vunpack.c.l.b16 %v1080
    %v1218 = vunpack.c.h.b16 %v1080
    %v1219 = vunpack.c.l.b16 %v1081
    %v1220 = vunpack.c.h.b16 %v1081
    %v1221 = vunpack.c.l.b16 %v1082
    %v1222 = vunpack.c.h.b16 %v1082
    %v1223 = vunpack.c.l.b16 %v1083
    %v1224 = vunpack.c.h.b16 %v1083
    %v1225 = vunpack.c.l.b16 %v1084
    %v1226 = vunpack.c.h.b16 %v1084
    %v1227 = vunpack.c.l.b16 %v1085
    %v1228 = vunpack.c.h.b16 %v1085
    %v1229 = vunpack.c.l.b16 %v1086
    %v1230 = vunpack.c.h.b16 %v1086
    %v1231 = vunpack.c.l.b16 %v1087
    %v1232 = vunpack.c.h.b16 %v1087
    %v1233 = vunpack.c.l.b16 %v1088
    %v1234 = vunpack.c.h.b16 %v1088
    %v1235 = vunpack.c.l.b16 %v1089
    %v1236 = vunpack.c.h.b16 %v1089
    %v1237 = vunpack.c.l.b16 %v1090
    %v1238 = vunpack.c.h.b16 %v1090
    %v1239 = vunpack.c.l.b16 %v1091
    %v1240 = vunpack.c.h.b16 %v1091
    %v1241 = vunpack.c.l.b16 %v1092
    %v1242 = vunpack.c.h.b16 %v1092
    %v1243 = vunpack.c.l.b16 %v1093
    %v1244 = vunpack.c.h.b16 %v1093
    %v1245 = vunpack.c.l.b16 %v1094
    %v1246 = vunpack.c.h.b16 %v1094
    %v1247 = vunpack.c.l.b16 %v1095
    %v1248 = vunpack.c.h.b16 %v1095
    %v1249 = vunpack.c.l.b16 %v1096
    %v1250 = vunpack.c.h.b16 %v1096
    %v1251 = vunpack.c.l.b16 %v1097
    %v1252 = vunpack.c.h.b16 %v1097
    %v1253 = vunpack.c.l.b16 %v1098
    %v1254 = vunpack.c.h.b16 %v1098
    %v1255 = vpack.c.b16 %v1161, %v1159
    %v1256 = vpack.c.b16 %v1162, %v1160
    %v1257 = vpack.c.b16 %v1165, %v1163
    %v1258 = vpack.c.b16 %v1166, %v1164
    %v1259 = vpack.c.b16 %v1169, %v1167
    %v1260 = vpack.c.b16 %v1170, %v1168
    %v1261 = vpack.c.b16 %v1173, %v1171
    %v1262 = vpack.c.b16 %v1174, %v1172
    %v1263 = vpack.c.b16 %v1177, %v1175
    %v1264 = vpack.c.b16 %v1178, %v1176
    %v1265 = vpack.c.b16 %v1181, %v1179
    %v1266 = vpack.c.b16 %v1182, %v1180
    %v1267 = vpack.c.b16 %v1185, %v1183
    %v1268 = vpack.c.b16 %v1186, %v1184
    %v1269 = vpack.c.b16 %v1189, %v1187
    %v1270 = vpack.c.b16 %v1190, %v1188
    %v1271 = vpack.c.b16 %v1193, %v1191
    %v1272 = vpack.c.b16 %v1194, %v1192
    %v1273 = vpack.c.b16 %v1197, %v1195
    %v1274 = vpack.c.b16 %v1198, %v1196
    %v1275 = vpack.c.b16 %v1201, %v1199
    %v1276 = vpack.c.b16 %v1202, %v1200
    %v1277 = vpack.c.b16 %v1205, %v1203
    %v1278 = vpack.c.b16 %v1206, %v1204
    %v1279 = vpack.c.b16 %v1209, %v1207
    %v1280 = vpack.c.b16 %v1210, %v1208
    %v1281 = vpack.c.b16 %v1213, %v1211
    %v1282 = vpack.c.b16 %v1214, %v1212
    %v1283 = vpack.c.b16 %v1217, %v1215
    %v1284 = vpack.c.b16 %v1218, %v1216
    %v1285 = vpack.c.b16 %v1221, %v1219
    %v1286 = vpack.c.b16 %v1222, %v1220
    %v1287 = vpack.c.b16 %v1225, %v1223
    %v1288 = vpack.c.b16 %v1226, %v1224
    %v1289 = vpack.c.b16 %v1229, %v1227
    %v1290 = vpack.c.b16 %v1230, %v1228
    %v1291 = vpack.c.b16 %v1233, %v1231
    %v1292 = vpack.c.b16 %v1234, %v1232
    %v1293 = vpack.c.b16 %v1237, %v1235
    %v1294 = vpack.c.b16 %v1238, %v1236
    %v1295 = vpack.c.b16 %v1241, %v1239
    %v1296 = vpack.c.b16 %v1242, %v1240
    %v1297 = vpack.c.b16 %v1245, %v1243
    %v1298 = vpack.c.b16 %v1246, %v1244
    %v1299 = vpack.c.b16 %v1249, %v1247
    %v1300 = vpack.c.b16 %v1250, %v1248
    %v1301 = vpack.c.b16 %v1253, %v1251
    %v1302 = vpack.c.b16 %v1254, %v1252
    %1351 = vmatprep.subr.bf16.mxu0 %v1256
    %1352 = vmatpush1.bf16.msra.mxu0 %v1255
    %1353 = vmatprep.subr.bf16.mxu0 %v1258
    %1354 = vmatpush1.bf16.msra.mxu0 %v1257
    %1355 = vmatprep.subr.bf16.mxu0 %v1260
    %1356 = vmatpush1.bf16.msra.mxu0 %v1259
    %1357 = vmatprep.subr.bf16.mxu0 %v1262
    %1358 = vmatpush1.bf16.msra.mxu0 %v1261
    %1359 = vmatprep.subr.bf16.mxu0 %v1264
    %1360 = vmatpush1.bf16.msra.mxu0 %v1263
    %1361 = vmatprep.subr.bf16.mxu0 %v1266
    %1362 = vmatpush1.bf16.msra.mxu0 %v1265
    %1363 = vmatprep.subr.bf16.mxu0 %v1268
    %1364 = vmatpush1.bf16.msra.mxu0 %v1267
    %1365 = vmatprep.subr.bf16.mxu0 %v1270
    %1366 = vmatpush1.bf16.msra.mxu0 %v1269
    %1367 = vmatprep.subr.bf16.mxu0 %v1272
    %1368 = vmatpush1.bf16.msra.mxu0 %v1271
    %1369 = vmatprep.subr.bf16.mxu0 %v1274
    %1370 = vmatpush1.bf16.msra.mxu0 %v1273
    %1371 = vmatprep.subr.bf16.mxu0 %v1276
    %1372 = vmatpush1.bf16.msra.mxu0 %v1275
    %1373 = vmatprep.subr.bf16.mxu0 %v1278
    %1374 = vmatpush1.bf16.msra.mxu0 %v1277
    %1375 = vmatprep.subr.bf16.mxu0 %v1280
    %1376 = vmatpush1.bf16.msra.mxu0 %v1279
    %1377 = vmatprep.subr.bf16.mxu0 %v1282
    %1378 = vmatpush1.bf16.msra.mxu0 %v1281
    %1379 = vmatprep.subr.bf16.mxu0 %v1284
    %1380 = vmatpush1.bf16.msra.mxu0 %v1283
    %1381 = vmatprep.subr.bf16.mxu0 %v1286
    %1382 = vmatpush1.bf16.msra.mxu0 %v1285
    %1383 = vmatprep.mubr.bf16.mxu0 %v1049
    %1384 = vmatmul.mubr.bf16.gmra.mrb[0].mxu0 %v1048
    %v1385 = vpop.f32.mrb[0].mxu0
    %v1386 = vadd.f32 %v1104, %v1385
    %v1387 = vpop.f32.mrb[0].mxu0
    %v1388 = vadd.f32 %v1108, %v1387
    %v1389 = vpop.f32.mrb[0].mxu0
    %v1390 = vpop.f32.mrb[0].mxu0
    %1391 = vdwg.mxu0
    %1392 = vmatprep.subr.bf16.mxu0 %v1288
    %1393 = vmatpush1.bf16.msra.mxu0 %v1287
    %1394 = vmatprep.subr.bf16.mxu0 %v1290
    %1395 = vmatpush1.bf16.msra.mxu0 %v1289
    %1396 = vmatprep.subr.bf16.mxu0 %v1292
    %1397 = vmatpush1.bf16.msra.mxu0 %v1291
    %1398 = vmatprep.subr.bf16.mxu0 %v1294
    %1399 = vmatpush1.bf16.msra.mxu0 %v1293
    %1400 = vmatprep.subr.bf16.mxu0 %v1296
    %1401 = vmatpush1.bf16.msra.mxu0 %v1295
    %1402 = vmatprep.subr.bf16.mxu0 %v1298
    %1403 = vmatpush1.bf16.msra.mxu0 %v1297
    %1404 = vmatprep.subr.bf16.mxu0 %v1300
    %1405 = vmatpush1.bf16.msra.mxu0 %v1299
    %1406 = vmatprep.subr.bf16.mxu0 %v1302
    %1407 = vmatpush1.bf16.msra.mxu0 %v1301
    %1408 = vmatprep.subr.bf16.mxu0 0
    %1409 = vmatpush1.bf16.msra.mxu0 0
    %1410 = vmatprep.subr.bf16.mxu0 0
    %1411 = vmatpush1.bf16.msra.mxu0 0
    %1412 = vmatprep.subr.bf16.mxu0 0
    %1413 = vmatpush1.bf16.msra.mxu0 0
    %1414 = vmatprep.subr.bf16.mxu0 0
    %1415 = vmatpush1.bf16.msra.mxu0 0
    %1416 = vmatprep.subr.bf16.mxu0 0
    %1417 = vmatpush1.bf16.msra.mxu0 0
    %1418 = vmatprep.subr.bf16.mxu0 0
    %1419 = vmatpush1.bf16.msra.mxu0 0
    %1420 = vmatprep.subr.bf16.mxu0 0
    %1421 = vmatpush1.bf16.msra.mxu0 0
    %1422 = vmatprep.subr.bf16.mxu0 0
    %1423 = vmatpush1.bf16.msra.mxu0 0
    %1424 = vmatprep.mubr.bf16.mxu0 0
    %1425 = vmatmul.mubr.bf16.gmra.mrb[0].mxu0 %v1050
    %v1426 = vpop.f32.mrb[0].mxu0
    %v1427 = vadd.f32 %v1386, %v1426
    %v1428 = vpop.f32.mrb[0].mxu0
    %v1429 = vadd.f32 %v1388, %v1428
    %v1430 = vpop.f32.mrb[0].mxu0
    %v1431 = vpop.f32.mrb[0].mxu0
    %1432 = vdwg.mxu0
    %v1433 = vmul.f32 %v1429, 1.442695
    %v1434 = vpow.pop %v1433
    %v1435 = vld [vmem:[%s7] sm:$0xff]
    %v1436 = vmul.f32 %v1434, %v1435
    %v1437 = vadd.f32 %v1427, %v1436
    %v1438 = vtanh.pop %v1437
    %1439 = vst [vmem:[#allocation10] sm:$0xff] %v1438
    // Predicated region
    $region50: #{tpu_custom_call.1} parent=1 // pred_check
      _
    $region51: #{tpu_custom_call.1} parent=1 // pred_check_branch
      %1441 = sbr.rel (0) target = $region53
    $region52: #{tpu_custom_call.1} parent=1 // pred_region
      %s1443 = ssub.s32 128, 128
      %1444 = vsyncadd [#allocation4], %s1443
      %s1446 = sshll.u32 [#allocation10], 4
      %s1447 = int_to_ptr.vmem [resolvable:$true] %s1446
      %1449 = dma.vmem_to_hbm [thread:$0]  %s1447, 128, %s8, [#allocation4]
    $region53: #{tpu_custom_call.1} parent=1 // pred_fallthru
      _
    // Predicated region
    $region54: #{tpu_custom_call.1} parent=1 // pred_check
      _
    $region55: #{tpu_custom_call.1} parent=1 // pred_check_branch
      %1451 = sbr.rel (0) target = $region57
    $region56: #{tpu_custom_call.1} parent=1 // pred_region
      %1452 = dma.done [#allocation4], 128
    $region57: #{tpu_custom_call.1} parent=1 // pred_fallthru
      _
    %1453 = vsyncpa [#allocation3], 1
    %1454 = vsyncpa [#allocation6], 1
    %1455 = vsyncpa [#allocation9], 1
    %1456 = vsyncpa [#allocation4], 1

</llo_original>
